<compile_context>
chip_gen: v5e
topology: v5e:2x2
jax: 0.10.0
libtpu: 0.0.40
codegen_flags: <defaults>
</compile_context>

<pallas_src>
import functools

import jax
import jax.numpy as jnp
from jax.experimental import pallas as pl
from jax.experimental.pallas import tpu as pltpu


def _round_up(x, m):
    return ((x + m - 1) // m) * m


def _mlp_kernel(num_extra_layers, rows_ref, cols_ref, *refs):
    """MLP hot path for one batch tile.

    refs layout:
      [W1_rows, W1_cols, b1,            # first layer, split so no concat
       W_2, b_2, ..., W_n, b_n,         # remaining hidden layers
       w_last_row, b_last,              # final Linear(hidden, 1), row vector
       out_ref]
    Weights are (in, out); biases are (1, out); w_last_row is (1, hidden).
    """
    out_ref = refs[-1]

    w1r = refs[0][...]
    w1c = refs[1][...]
    b1 = refs[2][...]

    # First layer: split matmul replaces concat([rows, cols]) @ W1.
    h = jnp.dot(rows_ref[...], w1r, preferred_element_type=jnp.float32)
    h = h + jnp.dot(cols_ref[...], w1c, preferred_element_type=jnp.float32)
    h = jnp.maximum(h + b1, 0.0)  # non_linear = ReLU; dropout -> identity

    idx = 3
    for _ in range(num_extra_layers):
        w = refs[idx][...]
        b = refs[idx + 1][...]
        idx += 2
        h = jnp.maximum(
            jnp.dot(h, w, preferred_element_type=jnp.float32) + b, 0.0)

    # Final Linear(hidden, 1): VPU multiply + lane reduce (no width-1 MXU pass).
    w_last = refs[idx][...]       # (1, hidden)
    b_last = refs[idx + 1][...]   # (1, 1)
    out_ref[...] = jnp.sum(h * w_last, axis=-1, keepdims=True) + b_last


def deep_factor_forward(row_ids, col_ids, params, *, tile_b=256):
    """Embedding gather (plain JAX glue) + batch-gridded Pallas MLP kernel."""
    U, V, stack_W, stack_b, W_last, b_last = params

    rows = jnp.take(U, row_ids, axis=0).astype(jnp.float32)   # (B, row_rank)
    cols = jnp.take(V, col_ids, axis=0).astype(jnp.float32)   # (B, col_rank)
    B = rows.shape[0]
    row_rank = rows.shape[1]
    col_rank = cols.shape[1]

    # Batch tile: multiple of 8 (sublane), pad B up to a whole number of tiles.
    TB = min(tile_b, _round_up(B, 8))
    B_pad = _round_up(B, TB)
    if B_pad != B:
        rows = jnp.pad(rows, ((0, B_pad - B), (0, 0)))
        cols = jnp.pad(cols, ((0, B_pad - B), (0, 0)))
    grid = (B_pad // TB,)

    # First-layer weight split (done once in the wrapper, not per tile).
    W1 = stack_W[0]
    flat_params = [
        W1[:row_rank, :],                 # (row_rank, H1)
        W1[row_rank:, :],                 # (col_rank, H1)
        stack_b[0].reshape(1, -1),        # (1, H1)
    ]
    for W, b in zip(stack_W[1:], stack_b[1:]):
        flat_params.append(W)             # (in, out)
        flat_params.append(b.reshape(1, -1))
    flat_params.append(W_last.reshape(1, -1))   # (1, hidden_last) row vector
    flat_params.append(b_last.reshape(1, 1))    # (1, 1)

    kernel = functools.partial(_mlp_kernel, len(stack_W) - 1)

    # Activations: tiled over batch; weights/biases: constant index_map so
    # Pallas keeps them resident in VMEM across grid steps.
    in_specs = [
        pl.BlockSpec((TB, row_rank), lambda i: (i, 0)),
        pl.BlockSpec((TB, col_rank), lambda i: (i, 0)),
    ] + [pl.BlockSpec(p.shape, lambda i: (0, 0)) for p in flat_params]
    out_spec = pl.BlockSpec((TB, 1), lambda i: (i, 0))

    # Advisory cost estimate so XLA can schedule the gather around the kernel.
    matmul_flops = 2 * B_pad * sum(int(W.shape[0]) * int(W.shape[1])
                                   for W in stack_W)
    matmul_flops += 2 * B_pad * int(W_last.shape[0])
    bytes_accessed = (rows.size + cols.size + B_pad) * 4
    bytes_accessed += sum(int(p.size) for p in flat_params) * 4
    cost = pl.CostEstimate(flops=matmul_flops, transcendentals=0,
                           bytes_accessed=int(bytes_accessed))

    out = pl.pallas_call(
        kernel,
        out_shape=jax.ShapeDtypeStruct((B_pad, 1), jnp.float32),
        grid=grid,
        in_specs=in_specs,
        out_specs=out_spec,
        compiler_params=pltpu.CompilerParams(
            dimension_semantics=("parallel",),       # shard batch across TCs (v7x)
            vmem_limit_bytes=32 * 1024 * 1024,       # explicit, safe on v5e/v6e/v7x
        ),
        cost_estimate=cost,
    )(rows, cols, *flat_params)

    return jnp.squeeze(out[:B, :])  # (B,) — matches torch's .squeeze()


def init_params(key, n_rows, n_cols, row_rank, col_rank, hidden_sizes):
    """Deterministic synthetic init mirroring the PyTorch module's shapes."""
    keys = jax.random.split(key, 8)
    U = jax.random.normal(keys[0], (n_rows, row_rank), jnp.float32)   # nn.Embedding
    V = jax.random.normal(keys[1], (n_cols, col_rank), jnp.float32)

    sizes = [row_rank + col_rank] + list(hidden_sizes)
    stack_W, stack_b = [], []
    k = keys[2]
    for prev, curr in zip(sizes[:-1], sizes[1:]):
        k, k_w, k_b = jax.random.split(k, 3)
        bound = 1.0 / jnp.sqrt(prev)
        # nn.Linear weight is (out, in); store transposed (in, out) for x @ W.
        stack_W.append(jax.random.uniform(k_w, (prev, curr), jnp.float32, -bound, bound))
        stack_b.append(jax.random.uniform(k_b, (curr,), jnp.float32, -bound, bound))

    last_in = sizes[-1]
    bound = 1.0 / jnp.sqrt(last_in)
    W_last = jax.random.uniform(keys[3], (last_in, 1), jnp.float32, -bound, bound)
    b_last = jax.random.uniform(keys[4], (1,), jnp.float32, -bound, bound)
    return U, V, stack_W, stack_b, W_last, b_last


def reference_forward(row_ids, col_ids, params):
    """Pure-JAX reference for correctness checking."""
    U, V, stack_W, stack_b, W_last, b_last = params
    h = jnp.concatenate([U[row_ids], V[col_ids]], axis=-1)
    for W, b in zip(stack_W, stack_b):
        h = jnp.maximum(h @ W + b, 0.0)
    return jnp.squeeze(h @ W_last + b_last)


if __name__ == "__main__":
    # Small shapes consistent with the module's forward.
    n_rows, n_cols = 10, 12
    row_rank, col_rank = 16, 16
    hidden_sizes = [32, 16]

    key = jax.random.PRNGKey(0)
    k_params, k_r, k_c = jax.random.split(key, 3)
    params = init_params(k_params, n_rows, n_cols, row_rank, col_rank, hidden_sizes)

    # Case 1: tiny batch (single tile, no padding beyond sublane alignment).
    batch = 8
    row_ids = jax.random.randint(k_r, (batch,), 0, n_rows, dtype=jnp.int32)
    col_ids = jax.random.randint(k_c, (batch,), 0, n_cols, dtype=jnp.int32)

    out = deep_factor_forward(row_ids, col_ids, params)
    out = jax.block_until_ready(out)
    ref = reference_forward(row_ids, col_ids, params)
    assert out.shape == (batch,), out.shape
    assert jnp.allclose(out, ref, atol=1e-5, rtol=1e-5), (out, ref)

    # Case 2: ragged multi-tile batch (exercises the grid + padding path).
    batch2 = 300
    k_r2, k_c2 = jax.random.split(jax.random.PRNGKey(1))
    row_ids2 = jax.random.randint(k_r2, (batch2,), 0, n_rows, dtype=jnp.int32)
    col_ids2 = jax.random.randint(k_c2, (batch2,), 0, n_cols, dtype=jnp.int32)

    out2 = deep_factor_forward(row_ids2, col_ids2, params, tile_b=128)
    out2 = jax.block_until_ready(out2)
    ref2 = reference_forward(row_ids2, col_ids2, params)
    assert out2.shape == (batch2,), out2.shape
    assert jnp.allclose(out2, ref2, atol=1e-5, rtol=1e-5)

    print("KERNEL_OK")
</pallas_src>

<mosaic_0001>
module attributes {stable_mosaic.version = 11 : i64} {
  func.func @_mlp_kernel(%arg0: i32, %arg1: memref<8x16xf32, #tpu.memory_space<vmem>>, %arg2: memref<8x16xf32, #tpu.memory_space<vmem>>, %arg3: memref<16x32xf32, #tpu.memory_space<vmem>>, %arg4: memref<16x32xf32, #tpu.memory_space<vmem>>, %arg5: memref<1x32xf32, #tpu.memory_space<vmem>>, %arg6: memref<32x16xf32, #tpu.memory_space<vmem>>, %arg7: memref<1x16xf32, #tpu.memory_space<vmem>>, %arg8: memref<1x16xf32, #tpu.memory_space<vmem>>, %arg9: memref<1x1xf32, #tpu.memory_space<vmem>>, %arg10: memref<8x1xf32, #tpu.memory_space<vmem>>) attributes {dimension_semantics = [#tpu.dimension_semantics<parallel>], iteration_bounds = array<i64: 1>, scalar_prefetch = 0 : i64, scratch_operands = 0 : i64, tpu.core_type = #tpu.core_type<tc>, window_params = [{transform_indices = @transform_0, window_bounds = array<i64: 8, 16>}, {transform_indices = @transform_1, window_bounds = array<i64: 8, 16>}, {pipeline_mode = #tpu.pipeline_mode<synchronous>, transform_indices = @transform_2, window_bounds = array<i64: 16, 32>}, {pipeline_mode = #tpu.pipeline_mode<synchronous>, transform_indices = @transform_3, window_bounds = array<i64: 16, 32>}, {pipeline_mode = #tpu.pipeline_mode<synchronous>, transform_indices = @transform_4, window_bounds = array<i64: 1, 32>}, {pipeline_mode = #tpu.pipeline_mode<synchronous>, transform_indices = @transform_5, window_bounds = array<i64: 32, 16>}, {pipeline_mode = #tpu.pipeline_mode<synchronous>, transform_indices = @transform_6, window_bounds = array<i64: 1, 16>}, {pipeline_mode = #tpu.pipeline_mode<synchronous>, transform_indices = @transform_7, window_bounds = array<i64: 1, 16>}, {pipeline_mode = #tpu.pipeline_mode<synchronous>, transform_indices = @transform_8, window_bounds = array<i64: 1, 1>}, {transform_indices = @transform_9, window_bounds = array<i64: 8, 1>}]} {
    %c0 = arith.constant 0 : index
    %c0_0 = arith.constant 0 : index
    %0 = vector.load %arg3[%c0, %c0_0] : memref<16x32xf32, #tpu.memory_space<vmem>>, vector<16x32xf32>
    %c0_1 = arith.constant 0 : index
    %c0_2 = arith.constant 0 : index
    %1 = vector.load %arg4[%c0_1, %c0_2] : memref<16x32xf32, #tpu.memory_space<vmem>>, vector<16x32xf32>
    %c0_3 = arith.constant 0 : index
    %c0_4 = arith.constant 0 : index
    %2 = vector.load %arg5[%c0_3, %c0_4] : memref<1x32xf32, #tpu.memory_space<vmem>>, vector<1x32xf32>
    %c0_5 = arith.constant 0 : index
    %c0_6 = arith.constant 0 : index
    %3 = vector.load %arg1[%c0_5, %c0_6] : memref<8x16xf32, #tpu.memory_space<vmem>>, vector<8x16xf32>
    %cst = arith.constant dense<0.000000e+00> : vector<8x32xf32>
    %4 = tpu.matmul %3, %0, %cst {dimension_numbers = #tpu.dot_dimension_numbers<[1], [0], [0], [1], [0, 0, 1, 1], [], []>} : vector<8x16xf32>, vector<16x32xf32>, vector<8x32xf32> -> vector<8x32xf32>
    %c0_7 = arith.constant 0 : index
    %c0_8 = arith.constant 0 : index
    %5 = vector.load %arg2[%c0_7, %c0_8] : memref<8x16xf32, #tpu.memory_space<vmem>>, vector<8x16xf32>
    %cst_9 = arith.constant dense<0.000000e+00> : vector<8x32xf32>
    %6 = tpu.matmul %5, %1, %cst_9 {dimension_numbers = #tpu.dot_dimension_numbers<[1], [0], [0], [1], [0, 0, 1, 1], [], []>} : vector<8x16xf32>, vector<16x32xf32>, vector<8x32xf32> -> vector<8x32xf32>
    %7 = arith.addf %4, %6 : vector<8x32xf32>
    %8 = vector.broadcast %2 : vector<1x32xf32> to vector<8x32xf32>
    %9 = arith.addf %7, %8 : vector<8x32xf32>
    %cst_10 = arith.constant 0.000000e+00 : f32
    %10 = vector.broadcast %cst_10 : f32 to vector<8x32xf32>
    %11 = arith.maximumf %9, %10 : vector<8x32xf32>
    %c0_11 = arith.constant 0 : index
    %c0_12 = arith.constant 0 : index
    %12 = vector.load %arg6[%c0_11, %c0_12] : memref<32x16xf32, #tpu.memory_space<vmem>>, vector<32x16xf32>
    %c0_13 = arith.constant 0 : index
    %c0_14 = arith.constant 0 : index
    %13 = vector.load %arg7[%c0_13, %c0_14] : memref<1x16xf32, #tpu.memory_space<vmem>>, vector<1x16xf32>
    %cst_15 = arith.constant dense<0.000000e+00> : vector<8x16xf32>
    %14 = tpu.matmul %11, %12, %cst_15 {dimension_numbers = #tpu.dot_dimension_numbers<[1], [0], [0], [1], [0, 0, 1, 1], [], []>} : vector<8x32xf32>, vector<32x16xf32>, vector<8x16xf32> -> vector<8x16xf32>
    %15 = vector.broadcast %13 : vector<1x16xf32> to vector<8x16xf32>
    %16 = arith.addf %14, %15 : vector<8x16xf32>
    %cst_16 = arith.constant 0.000000e+00 : f32
    %17 = vector.broadcast %cst_16 : f32 to vector<8x16xf32>
    %18 = arith.maximumf %16, %17 : vector<8x16xf32>
    %c0_17 = arith.constant 0 : index
    %c0_18 = arith.constant 0 : index
    %19 = vector.load %arg8[%c0_17, %c0_18] : memref<1x16xf32, #tpu.memory_space<vmem>>, vector<1x16xf32>
    %c0_19 = arith.constant 0 : index
    %c0_20 = arith.constant 0 : index
    %20 = vector.load %arg9[%c0_19, %c0_20] : memref<1x1xf32, #tpu.memory_space<vmem>>, vector<1x1xf32>
    %21 = vector.broadcast %19 : vector<1x16xf32> to vector<8x16xf32>
    %22 = arith.mulf %18, %21 : vector<8x16xf32>
    %cst_21 = arith.constant dense<0.000000e+00> : vector<8xf32>
    %23 = vector.multi_reduction <add>, %22, %cst_21 [1] : vector<8x16xf32> to vector<8xf32>
    %24 = vector.shape_cast %23 : vector<8xf32> to vector<8x1xf32>
    %25 = vector.broadcast %20 : vector<1x1xf32> to vector<8x1xf32>
    %26 = arith.addf %24, %25 : vector<8x1xf32>
    %c0_22 = arith.constant 0 : index
    %c0_23 = arith.constant 0 : index
    %27 = vector.load %arg10[%c0_22, %c0_23] : memref<8x1xf32, #tpu.memory_space<vmem>>, vector<8x1xf32>
    tpu.vector_store %arg10[%c0_22, %c0_23], %26 {strides = array<i32>} : memref<8x1xf32, #tpu.memory_space<vmem>>, vector<8x1xf32>,
    return
  }
  func.func @transform_0(%arg0: i32) -> (i32, i32) {
    %c0_i32 = arith.constant 0 : i32
    %c0_i32_0 = arith.constant 0 : i32
    return %arg0, %c0_i32 : i32, i32
  }
  func.func @transform_1(%arg0: i32) -> (i32, i32) {
    %c0_i32 = arith.constant 0 : i32
    %c0_i32_0 = arith.constant 0 : i32
    return %arg0, %c0_i32 : i32, i32
  }
  func.func @transform_2(%arg0: i32) -> (i32, i32) {
    %c0_i32 = arith.constant 0 : i32
    %c0_i32_0 = arith.constant 0 : i32
    %c0_i32_1 = arith.constant 0 : i32
    return %c0_i32, %c0_i32_0 : i32, i32
  }
  func.func @transform_3(%arg0: i32) -> (i32, i32) {
    %c0_i32 = arith.constant 0 : i32
    %c0_i32_0 = arith.constant 0 : i32
    %c0_i32_1 = arith.constant 0 : i32
    return %c0_i32, %c0_i32_0 : i32, i32
  }
  func.func @transform_4(%arg0: i32) -> (i32, i32) {
    %c0_i32 = arith.constant 0 : i32
    %c0_i32_0 = arith.constant 0 : i32
    %c0_i32_1 = arith.constant 0 : i32
    return %c0_i32, %c0_i32_0 : i32, i32
  }
  func.func @transform_5(%arg0: i32) -> (i32, i32) {
    %c0_i32 = arith.constant 0 : i32
    %c0_i32_0 = arith.constant 0 : i32
    %c0_i32_1 = arith.constant 0 : i32
    return %c0_i32, %c0_i32_0 : i32, i32
  }
  func.func @transform_6(%arg0: i32) -> (i32, i32) {
    %c0_i32 = arith.constant 0 : i32
    %c0_i32_0 = arith.constant 0 : i32
    %c0_i32_1 = arith.constant 0 : i32
    return %c0_i32, %c0_i32_0 : i32, i32
  }
  func.func @transform_7(%arg0: i32) -> (i32, i32) {
    %c0_i32 = arith.constant 0 : i32
    %c0_i32_0 = arith.constant 0 : i32
    %c0_i32_1 = arith.constant 0 : i32
    return %c0_i32, %c0_i32_0 : i32, i32
  }
  func.func @transform_8(%arg0: i32) -> (i32, i32) {
    %c0_i32 = arith.constant 0 : i32
    %c0_i32_0 = arith.constant 0 : i32
    %c0_i32_1 = arith.constant 0 : i32
    return %c0_i32, %c0_i32_0 : i32, i32
  }
  func.func @transform_9(%arg0: i32) -> (i32, i32) {
    %c0_i32 = arith.constant 0 : i32
    %c0_i32_0 = arith.constant 0 : i32
    return %arg0, %c0_i32 : i32, i32
  }
}

</mosaic_0001>

<llo_original>
// kernel: tpu_custom_call.1
$region0: #{tpu_custom_call.1}
  #allocation0 [shape = 'u32[]', space=smem, size = 0x4, offset = 0x4, fixed_abs, tag = 'smem constant byte address 0x4 - core index']
  #allocation1 [shape = 'u32[72,128]{1,0:T(1,128)}', space=vmem, size = 0x9000, scoped, tag = 'internal scratch']
  #allocation2 [shape = 'f32[1,1]{1,0:T(1,128)S(1)}', space=vmem, size = 0x200, scoped, tag = 'scoped memory for tpu_custom_call.1']
  %s0 = inlined_call_operand.vmem [shape: f32[8,16], index: 0, kind: input, shape index: {}]
  %s1 = inlined_call_operand.vmem [shape: f32[8,16], index: 1, kind: input, shape index: {}]
  %s2 = inlined_call_operand.vmem [shape: f32[16,32], index: 2, kind: input, shape index: {}]
  %s3 = inlined_call_operand.vmem [shape: f32[16,32], index: 3, kind: input, shape index: {}]
  %s4 = inlined_call_operand.vmem [shape: f32[1,32], index: 4, kind: input, shape index: {}]
  %s5 = inlined_call_operand.vmem [shape: f32[32,16], index: 5, kind: input, shape index: {}]
  %s6 = inlined_call_operand.vmem [shape: f32[1,16], index: 6, kind: input, shape index: {}]
  %s7 = inlined_call_operand.vmem [shape: f32[1,16], index: 7, kind: input, shape index: {}]
  %s8 = inlined_call_operand.<no memory space> [shape: f32[1,1], index: 8, kind: input, shape index: {}]
  %s9 = inlined_call_operand.vmem [shape: f32[8,1], index: 9, kind: output, shape index: {}]
  %s10 = sld [smem:[#allocation0]]
  $region46: #{tpu_custom_call.1} parent=0
    _
  %s12 = ssub.s32 1, %s10
  %s13 = scalar_select 0, %s12, %s10
  %v14 = vstv %s8
  %15 = vst [vmem:[#allocation2] sm:$0x1] %v14
  // Predicated region
  $region2: #{tpu_custom_call.1} parent=0 // pred_check
    _
  $region3: #{tpu_custom_call.1} parent=0 // pred_check_branch
    %17 = sbr.rel (0) target = $region5
  $region4: #{tpu_custom_call.1} parent=0 // pred_region
    _
  $region5: #{tpu_custom_call.1} parent=0 // pred_fallthru
    _
  // Predicated region
  $region6: #{tpu_custom_call.1} parent=0 // pred_check
    _
  $region7: #{tpu_custom_call.1} parent=0 // pred_check_branch
    %19 = sbr.rel (0) target = $region9
  $region8: #{tpu_custom_call.1} parent=0 // pred_region
    _
  $region9: #{tpu_custom_call.1} parent=0 // pred_fallthru
    _
  // Predicated region
  $region10: #{tpu_custom_call.1} parent=0 // pred_check
    _
  $region11: #{tpu_custom_call.1} parent=0 // pred_check_branch
    %21 = sbr.rel (0) target = $region13
  $region12: #{tpu_custom_call.1} parent=0 // pred_region
    _
  $region13: #{tpu_custom_call.1} parent=0 // pred_fallthru
    _
  // Predicated region
  $region14: #{tpu_custom_call.1} parent=0 // pred_check
    _
  $region15: #{tpu_custom_call.1} parent=0 // pred_check_branch
    %23 = sbr.rel (0) target = $region17
  $region16: #{tpu_custom_call.1} parent=0 // pred_region
    _
  $region17: #{tpu_custom_call.1} parent=0 // pred_fallthru
    _
  // Predicated region
  $region18: #{tpu_custom_call.1} parent=0 // pred_check
    _
  $region19: #{tpu_custom_call.1} parent=0 // pred_check_branch
    %25 = sbr.rel (0) target = $region21
  $region20: #{tpu_custom_call.1} parent=0 // pred_region
    _
  $region21: #{tpu_custom_call.1} parent=0 // pred_fallthru
    _
  // Predicated region
  $region22: #{tpu_custom_call.1} parent=0 // pred_check
    _
  $region23: #{tpu_custom_call.1} parent=0 // pred_check_branch
    %27 = sbr.rel (0) target = $region25
  $region24: #{tpu_custom_call.1} parent=0 // pred_region
    _
  $region25: #{tpu_custom_call.1} parent=0 // pred_fallthru
    _
  // Predicated region
  $region26: #{tpu_custom_call.1} parent=0 // pred_check
    _
  $region27: #{tpu_custom_call.1} parent=0 // pred_check_branch
    %29 = sbr.rel (0) target = $region29
  $region28: #{tpu_custom_call.1} parent=0 // pred_region
    _
  $region29: #{tpu_custom_call.1} parent=0 // pred_fallthru
    _
  // Predicated region
  $region30: #{tpu_custom_call.1} parent=0 // pred_check
    _
  $region31: #{tpu_custom_call.1} parent=0 // pred_check_branch
    %31 = sbr.rel (0) target = $region33
  $region32: #{tpu_custom_call.1} parent=0 // pred_region
    _
  $region33: #{tpu_custom_call.1} parent=0 // pred_fallthru
    _
  // Predicated region
  $region34: #{tpu_custom_call.1} parent=0 // pred_check
    _
  $region35: #{tpu_custom_call.1} parent=0 // pred_check_branch
    %33 = sbr.rel (0) target = $region37
  $region36: #{tpu_custom_call.1} parent=0 // pred_region
    _
  $region37: #{tpu_custom_call.1} parent=0 // pred_fallthru
    _
  %v34 = vld [vmem:[%s2] sm:$0xff]
  %v35 = vld [vmem:[%s2 + $0x8] sm:$0xff]
  %v36 = vld [vmem:[%s3] sm:$0xff]
  %v37 = vld [vmem:[%s3 + $0x8] sm:$0xff]
  %v38 = vld [vmem:[%s4] sm:$0x1]
  %v39 = vld [vmem:[%s0] sm:$0xff]
  %v40 = vld [vmem:[%s1] sm:$0xff]
  %vm41 = vcmask 130048
  %v43 = vsel %vm41, %v40, 0
  %45 = vmatpush.msra.mxu0 0.0
  %46 = vmatpush.msra.mxu0 0.0
  %47 = vmatpush.msra.mxu0 0.0
  %48 = vmatpush.msra.mxu0 0.0
  %49 = vmatpush.msra.mxu0 0.0
  %50 = vmatpush.msra.mxu0 0.0
  %51 = vmatpush.msra.mxu0 0.0
  %52 = vmatpush.msra.mxu0 0.0
  %53 = vmatpush.msra.mxu0 0.0
  %54 = vmatpush.msra.mxu0 0.0
  %55 = vmatpush.msra.mxu0 0.0
  %56 = vmatpush.msra.mxu0 0.0
  %57 = vmatpush.msra.mxu0 0.0
  %58 = vmatpush.msra.mxu0 0.0
  %59 = vmatpush.msra.mxu0 %v37
  %60 = vmatpush.msra.mxu0 %v36
  %61 = vmatmul.f32.gmra.mxu0 %v43
  %v62 = vpop.f32.mrf.mxu0
  %v63 = vadd.f32 0.0, %v62
  %64 = vdwg.mxu0
  %v66 = vsel %vm41, %v39, 0
  %68 = vmatpush.msra.mxu0 0.0
  %69 = vmatpush.msra.mxu0 0.0
  %70 = vmatpush.msra.mxu0 0.0
  %71 = vmatpush.msra.mxu0 0.0
  %72 = vmatpush.msra.mxu0 0.0
  %73 = vmatpush.msra.mxu0 0.0
  %74 = vmatpush.msra.mxu0 0.0
  %75 = vmatpush.msra.mxu0 0.0
  %76 = vmatpush.msra.mxu0 0.0
  %77 = vmatpush.msra.mxu0 0.0
  %78 = vmatpush.msra.mxu0 0.0
  %79 = vmatpush.msra.mxu0 0.0
  %80 = vmatpush.msra.mxu0 0.0
  %81 = vmatpush.msra.mxu0 0.0
  %82 = vmatpush.msra.mxu0 %v35
  %83 = vmatpush.msra.mxu0 %v34
  %84 = vmatmul.f32.gmra.mxu0 %v66
  %v85 = vpop.f32.mrf.mxu0
  %v86 = vadd.f32 %v63, %v85
  %87 = vdwg.mxu0
  %v89 = vperm.slane %v38, 0
  %v91 = vadd.f32 %v86, %v89
  %v92 = vmax.f32 %v91, 0.0
  %v93 = vld [vmem:[%s5] sm:$0xff]
  %v94 = vld [vmem:[%s5 + $0x8] sm:$0xff]
  %v95 = vld [vmem:[%s5 + $0x10] sm:$0xff]
  %v96 = vld [vmem:[%s5 + $0x18] sm:$0xff]
  %v97 = vld [vmem:[%s6] sm:$0x1]
  %v99 = vperm.slane %v97, 0
  %vm101 = vcmask 261120
  %v103 = vsel %vm101, %v92, 0
  %105 = vmatpush.msra.mxu0 0.0
  %106 = vmatpush.msra.mxu0 0.0
  %107 = vmatpush.msra.mxu0 0.0
  %108 = vmatpush.msra.mxu0 0.0
  %109 = vmatpush.msra.mxu0 0.0
  %110 = vmatpush.msra.mxu0 0.0
  %111 = vmatpush.msra.mxu0 0.0
  %112 = vmatpush.msra.mxu0 0.0
  %113 = vmatpush.msra.mxu0 0.0
  %114 = vmatpush.msra.mxu0 0.0
  %115 = vmatpush.msra.mxu0 0.0
  %116 = vmatpush.msra.mxu0 0.0
  %117 = vmatpush.msra.mxu0 %v96
  %118 = vmatpush.msra.mxu0 %v95
  %119 = vmatpush.msra.mxu0 %v94
  %120 = vmatpush.msra.mxu0 %v93
  %121 = vmatmul.f32.gmra.mxu0 %v103
  %v122 = vpop.f32.mrf.mxu0
  %v123 = vadd.f32 %v99, %v122
  %124 = vdwg.mxu0
  %v125 = vmax.f32 %v123, 0.0
  %v126 = vld [vmem:[%s7] sm:$0x1]
  %v127 = vld [vmem:[#allocation2] sm:$0x1]
  %v129 = vperm.slane %v126, 0
  %v131 = vmul.f32 %v125, %v129
  %v132 = vsel %vm41, %v131, 0.0
  %133 = vadd.xlane.f32.xlu0 %v132
  %v134 = vpop.xlane.xlu0 %133
  %v136 = vperm.slane %v127, 0
  %v138 = vadd.f32 %v134, %v136
  %vm139 = vcmask 7168
  %140 = vst.msk [vmem:[%s9] sm:$0xff] %vm139, %v138
  // Predicated region
  $region38: #{tpu_custom_call.1} parent=0 // pred_check
    _
  $region39: #{tpu_custom_call.1} parent=0 // pred_check_branch
    %142 = sbr.rel (0) target = $region41
  $region40: #{tpu_custom_call.1} parent=0 // pred_region
    _
  $region41: #{tpu_custom_call.1} parent=0 // pred_fallthru
    _
  // Predicated region
  $region42: #{tpu_custom_call.1} parent=0 // pred_check
    _
  $region43: #{tpu_custom_call.1} parent=0 // pred_check_branch
    %144 = sbr.rel (0) target = $region45
  $region44: #{tpu_custom_call.1} parent=0 // pred_region
    _
  $region45: #{tpu_custom_call.1} parent=0 // pred_fallthru
    _

</llo_original>
